<compile_context>
chip_gen: v7x
topology: tpu7x:2x2x1
jax: 0.10.0
libtpu: 0.0.40
codegen_flags: <defaults>
</compile_context>

<pallas_src>
import functools

import jax
import jax.numpy as jnp
from jax import lax
from jax.experimental import pallas as pl
from jax.experimental.pallas import tpu as pltpu


def _vmem_capacity_bytes():
    """Physical VMEM per TensorCore; conservative (v7x-sized) fallback."""
    try:
        return int(pltpu.get_tpu_info().vmem_capacity_bytes)
    except Exception:
        return 64 * 1024 * 1024


# ----------------------------- pass 1: mask ----------------------------------
def _mask_kernel(seedp_ref, mask_ref, psum_ref, *, k):
    """Separable max_pool3d(kernel=k, stride=1) on the zero-padded seed.

    seedp_ref : (1, D+k-1, H+k-1, W+k-1) bf16  zero-padded Bernoulli seed ({0,1})
    mask_ref  : (1, D, H, W)             bf16  keep mask = 1 - pooled seed
    psum_ref  : (1, 1, 1, W)             f32   sum of the keep mask over (D, H)
    """
    _, D, H, W = mask_ref.shape
    sp = seedp_ref[...].astype(jnp.float32)   # f32 compute (safe on v5e too)

    # Separable pooling: W (lanes) -> H (sublanes) -> D.  3*(k-1) maxima vs k^3.
    pw = sp[:, :, :, 0:W]
    for dx in range(1, k):
        pw = jnp.maximum(pw, sp[:, :, :, dx:dx + W])
    ph = pw[:, :, 0:H, :]
    for dy in range(1, k):
        ph = jnp.maximum(ph, pw[:, :, dy:dy + H, :])
    pd = ph[:, 0:D, :, :]
    for dz in range(1, k):
        pd = jnp.maximum(pd, ph[:, dz:dz + D, :, :])

    keep = 1.0 - pd                                   # f32, values in {0, 1}
    mask_ref[...] = keep.astype(mask_ref.dtype)       # bf16 store (exact for {0,1})
    # Fused partial reduction: avoids a separate XLA launch re-reading the mask.
    psum_ref[...] = jnp.sum(keep, axis=(1, 2), keepdims=True)


# ---------------------------- pass 2: hot path --------------------------------
def _apply_mask_kernel(scale_ref, x_ref, m_ref, o_ref):
    """out = x * mask * scale  (f32 compute; required on v5e, free when mem-bound).

    scale_ref : (1, 1) f32 in SMEM
    x_ref     : (1, TC, TS)
    m_ref     : (1, 1,  TS) bf16  broadcast over the channel tile
    o_ref     : (1, TC, TS)
    """
    scale = scale_ref[0, 0]
    m = m_ref[...].astype(jnp.float32)
    o_ref[...] = (x_ref[...].astype(jnp.float32) * m * scale).astype(o_ref.dtype)


# ------------------------------- wrapper --------------------------------------
def dropblock3d_forward(x, key, *, proba, block_size, training=True, donate_x=False):
    """Reproduces DropBlock3D.forward (training path) on TPU via Pallas."""
    assert 0.0 <= proba <= 1.0 and block_size > 0
    if (not training) or proba == 0.0:   # mirrors the `not training / gamma==0` guard
        return x

    k = int(block_size)
    gamma = proba / (k ** 2)             # NOTE: PyTorch source uses block_size**2 (not **3)

    B, C, D, H, W = x.shape
    S = D * H * W

    # Bernoulli seed (torch.rand(B,1,D,H,W).le_(gamma), channel-1 dim dropped),
    # stored in bf16 ({0,1} exact) to halve seed HBM traffic.
    # TODO(synk): generate the seed in-kernel via pltpu.prng_seed/prng_random_bits
    # to also skip this small HBM round-trip (kept in the wrapper so the output
    # verifies bit-exactly against the pure-JAX reference).
    seed = (jax.random.uniform(key, (B, D, H, W)) <= gamma).astype(jnp.bfloat16)

    # Pre-pad so the mask kernel only needs static slices.  left = k//2,
    # right = k-1-k//2; for even k this already encodes PyTorch's [:-1] crop.
    p = k // 2
    r = k - 1 - p
    seedp = jnp.pad(seed, ((0, 0), (p, r), (p, r), (p, r)))
    Dp, Hp, Wp = D + k - 1, H + k - 1, W + k - 1

    vmem_cap = _vmem_capacity_bytes()
    # ~48 MiB scoped limit on v7x (64 MiB phys), ~96 MiB on v5e/v6e (128 MiB phys).
    vmem_limit = int(min(vmem_cap * 3 // 4, 100 * 1024 * 1024))

    # ---- pass 1: bf16 keep mask (B, D, H, W) + fused per-batch partial sums ---
    # TODO(synk): for very large volumes (padded vol * ~5 f32 > vmem_limit) tile
    # this pass over D with a (k-1) halo; not needed for typical DropBlock sizes.
    mask, psums = pl.pallas_call(
        functools.partial(_mask_kernel, k=k),
        out_shape=(jax.ShapeDtypeStruct((B, D, H, W), jnp.bfloat16),
                   jax.ShapeDtypeStruct((B, 1, 1, W), jnp.float32)),
        grid=(B,),
        in_specs=[pl.BlockSpec((1, Dp, Hp, Wp), lambda b: (b, 0, 0, 0))],
        out_specs=(pl.BlockSpec((1, D, H, W), lambda b: (b, 0, 0, 0)),
                   pl.BlockSpec((1, 1, 1, W), lambda b: (b, 0, 0, 0))),
        compiler_params=pltpu.CompilerParams(
            dimension_semantics=("parallel",),
            vmem_limit_bytes=vmem_limit,
        ),
    )(seedp)

    # scale = mask.numel() / mask.sum()  (numel includes the channel-1 dim -> B*S).
    # Mirrors PyTorch exactly: inf (-> NaN at dropped positions) if all dropped.
    scale = (jnp.float32(B * S) / jnp.sum(psums)).reshape(1, 1).astype(jnp.float32)

    # ---- pass 2: tiled, lane-dense elementwise x * mask * scale --------------
    x_r = x.reshape(B, C, S)
    m_r = mask.reshape(B, 1, S)

    xbytes = x.dtype.itemsize
    sub = {4: 8, 2: 16, 1: 32}.get(xbytes, 8)        # sublane packing per dtype
    TC = C if (C <= 128 or C % sub != 0) else 128

    if S % 128 != 0:
        TS = S                                       # full extent keeps BlockSpec legal
    else:
        # Budget double-buffered x-in + out + bf16 mask tiles against VMEM.
        tile_budget = min(vmem_cap // 2, 96 * 1024 * 1024)
        ts_cap = tile_budget // (4 * TC * xbytes + 4)
        TS = min(S, 32768, max(128, (ts_cap // 128) * 128))

    grid = (B, pl.cdiv(S, TS), pl.cdiv(C, TC))       # c fastest -> mask stays resident

    out_r = pl.pallas_call(
        _apply_mask_kernel,
        out_shape=jax.ShapeDtypeStruct((B, C, S), x.dtype),
        grid=grid,
        in_specs=[
            pl.BlockSpec(memory_space=pltpu.MemorySpace.SMEM),        # scale (1, 1)
            pl.BlockSpec((1, TC, TS), lambda b, s, c: (b, c, s)),     # x tile
            pl.BlockSpec((1, 1, TS), lambda b, s, c: (b, 0, s)),      # mask tile (no c dep)
        ],
        out_specs=pl.BlockSpec((1, TC, TS), lambda b, s, c: (b, c, s)),
        compiler_params=pltpu.CompilerParams(
            dimension_semantics=("parallel", "parallel", "parallel"),
            vmem_limit_bytes=vmem_limit,
        ),
        # Alias the output onto x's HBM buffer when the caller can donate x.
        input_output_aliases=({1: 0} if donate_x else {}),
    )(scale, x_r, m_r)

    return out_r.reshape(B, C, D, H, W)


# ------------------------------ reference -------------------------------------
def _reference(x, key, *, proba, block_size):
    """Pure-JAX reference mirroring the PyTorch semantics."""
    k = int(block_size)
    gamma = proba / (k ** 2)
    B, C, D, H, W = x.shape
    seed = (jax.random.uniform(key, (B, D, H, W)) <= gamma).astype(jnp.float32)
    p = k // 2
    pooled = lax.reduce_window(
        seed, 0.0, lax.max,
        window_dimensions=(1, k, k, k),
        window_strides=(1, 1, 1, 1),
        padding=((0, 0), (p, p), (p, p), (p, p)),
    )
    if k % 2 == 0:
        pooled = pooled[:, :-1, :-1, :-1]
    mask = 1.0 - pooled
    scale = mask.size / mask.sum()
    return x * mask[:, None] * scale


if __name__ == "__main__":
    key = jax.random.PRNGKey(0)
    kx, kmask = jax.random.split(key)

    B, C, D, H, W = 2, 4, 8, 8, 8
    x = jax.random.normal(kx, (B, C, D, H, W), dtype=jnp.float32)

    proba = 0.2
    refs = {}
    for block_size in (3, 4):                 # odd and even kernel sizes
        out = dropblock3d_forward(x, kmask, proba=proba, block_size=block_size)
        jax.block_until_ready(out)
        ref = _reference(x, kmask, proba=proba, block_size=block_size)
        refs[block_size] = ref
        assert out.shape == x.shape and out.dtype == x.dtype
        assert jnp.allclose(out, ref, rtol=1e-5, atol=1e-5), f"mismatch for k={block_size}"

    # eval / proba==0 path is identity
    assert jnp.array_equal(dropblock3d_forward(x, kmask, proba=proba, block_size=3,
                                               training=False), x)

    # donated-x path (output aliases x's HBM buffer); run last.
    out_d = dropblock3d_forward(x, kmask, proba=proba, block_size=3, donate_x=True)
    jax.block_until_ready(out_d)
    assert jnp.allclose(out_d, refs[3], rtol=1e-5, atol=1e-5)

    print("KERNEL_OK")
</pallas_src>

<mosaic_0001>
module attributes {stable_mosaic.version = 11 : i64} {
  func.func @_mask_kernel(%arg0: i32, %arg1: memref<1x10x10x10xbf16, #tpu.memory_space<vmem>>, %arg2: memref<1x8x8x8xbf16, #tpu.memory_space<vmem>>, %arg3: memref<1x1x1x8xf32, #tpu.memory_space<vmem>>) attributes {dimension_semantics = [#tpu.dimension_semantics<parallel>], iteration_bounds = array<i64: 2>, scalar_prefetch = 0 : i64, scratch_operands = 0 : i64, tpu.core_type = #tpu.core_type<tc>, window_params = [{transform_indices = @transform_0, window_bounds = array<i64: 1, 10, 10, 10>}, {transform_indices = @transform_1, window_bounds = array<i64: 1, 8, 8, 8>}, {transform_indices = @transform_2, window_bounds = array<i64: 1, 1, 1, 8>}]} {
    %c0 = arith.constant 0 : index
    %c0_0 = arith.constant 0 : index
    %c0_1 = arith.constant 0 : index
    %c0_2 = arith.constant 0 : index
    %0 = vector.load %arg1[%c0, %c0_0, %c0_1, %c0_2] : memref<1x10x10x10xbf16, #tpu.memory_space<vmem>>, vector<1x10x10x10xbf16>
    %1 = arith.extf %0 : vector<1x10x10x10xbf16> to vector<1x10x10x10xf32>
    %2 = vector.extract_strided_slice %1 {offsets = [0, 0, 0, 0], sizes = [1, 10, 10, 8], strides = [1, 1, 1, 1]} : vector<1x10x10x10xf32> to vector<1x10x10x8xf32>
    %3 = vector.extract_strided_slice %1 {offsets = [0, 0, 0, 1], sizes = [1, 10, 10, 8], strides = [1, 1, 1, 1]} : vector<1x10x10x10xf32> to vector<1x10x10x8xf32>
    %4 = arith.maximumf %2, %3 : vector<1x10x10x8xf32>
    %5 = vector.extract_strided_slice %1 {offsets = [0, 0, 0, 2], sizes = [1, 10, 10, 8], strides = [1, 1, 1, 1]} : vector<1x10x10x10xf32> to vector<1x10x10x8xf32>
    %6 = arith.maximumf %4, %5 : vector<1x10x10x8xf32>
    %7 = vector.extract_strided_slice %6 {offsets = [0, 0, 0, 0], sizes = [1, 10, 8, 8], strides = [1, 1, 1, 1]} : vector<1x10x10x8xf32> to vector<1x10x8x8xf32>
    %8 = vector.extract_strided_slice %6 {offsets = [0, 0, 1, 0], sizes = [1, 10, 8, 8], strides = [1, 1, 1, 1]} : vector<1x10x10x8xf32> to vector<1x10x8x8xf32>
    %9 = arith.maximumf %7, %8 : vector<1x10x8x8xf32>
    %10 = vector.extract_strided_slice %6 {offsets = [0, 0, 2, 0], sizes = [1, 10, 8, 8], strides = [1, 1, 1, 1]} : vector<1x10x10x8xf32> to vector<1x10x8x8xf32>
    %11 = arith.maximumf %9, %10 : vector<1x10x8x8xf32>
    %12 = vector.extract_strided_slice %11 {offsets = [0, 0, 0, 0], sizes = [1, 8, 8, 8], strides = [1, 1, 1, 1]} : vector<1x10x8x8xf32> to vector<1x8x8x8xf32>
    %13 = vector.extract_strided_slice %11 {offsets = [0, 1, 0, 0], sizes = [1, 8, 8, 8], strides = [1, 1, 1, 1]} : vector<1x10x8x8xf32> to vector<1x8x8x8xf32>
    %14 = arith.maximumf %12, %13 : vector<1x8x8x8xf32>
    %15 = vector.extract_strided_slice %11 {offsets = [0, 2, 0, 0], sizes = [1, 8, 8, 8], strides = [1, 1, 1, 1]} : vector<1x10x8x8xf32> to vector<1x8x8x8xf32>
    %16 = arith.maximumf %14, %15 : vector<1x8x8x8xf32>
    %cst = arith.constant 1.000000e+00 : f32
    %17 = vector.broadcast %cst : f32 to vector<1x8x8x8xf32>
    %18 = arith.subf %17, %16 : vector<1x8x8x8xf32>
    %19 = arith.truncf %18 : vector<1x8x8x8xf32> to vector<1x8x8x8xbf16>
    %c0_3 = arith.constant 0 : index
    %c0_4 = arith.constant 0 : index
    %c0_5 = arith.constant 0 : index
    %c0_6 = arith.constant 0 : index
    %20 = vector.load %arg2[%c0_3, %c0_4, %c0_5, %c0_6] : memref<1x8x8x8xbf16, #tpu.memory_space<vmem>>, vector<1x8x8x8xbf16>
    tpu.vector_store %arg2[%c0_3, %c0_4, %c0_5, %c0_6], %19 {strides = array<i32>} : memref<1x8x8x8xbf16, #tpu.memory_space<vmem>>, vector<1x8x8x8xbf16>,
    %cst_7 = arith.constant dense<0.000000e+00> : vector<1x8xf32>
    %21 = vector.multi_reduction <add>, %18, %cst_7 [1, 2] : vector<1x8x8x8xf32> to vector<1x8xf32>
    %22 = vector.shape_cast %21 : vector<1x8xf32> to vector<1x1x1x8xf32>
    %c0_8 = arith.constant 0 : index
    %c0_9 = arith.constant 0 : index
    %c0_10 = arith.constant 0 : index
    %c0_11 = arith.constant 0 : index
    %23 = vector.load %arg3[%c0_8, %c0_9, %c0_10, %c0_11] : memref<1x1x1x8xf32, #tpu.memory_space<vmem>>, vector<1x1x1x8xf32>
    tpu.vector_store %arg3[%c0_8, %c0_9, %c0_10, %c0_11], %22 {strides = array<i32>} : memref<1x1x1x8xf32, #tpu.memory_space<vmem>>, vector<1x1x1x8xf32>,
    return
  }
  func.func @transform_0(%arg0: i32) -> (i32, i32, i32, i32) {
    %c0_i32 = arith.constant 0 : i32
    %c0_i32_0 = arith.constant 0 : i32
    %c0_i32_1 = arith.constant 0 : i32
    %c0_i32_2 = arith.constant 0 : i32
    return %arg0, %c0_i32, %c0_i32_0, %c0_i32_1 : i32, i32, i32, i32
  }
  func.func @transform_1(%arg0: i32) -> (i32, i32, i32, i32) {
    %c0_i32 = arith.constant 0 : i32
    %c0_i32_0 = arith.constant 0 : i32
    %c0_i32_1 = arith.constant 0 : i32
    %c0_i32_2 = arith.constant 0 : i32
    return %arg0, %c0_i32, %c0_i32_0, %c0_i32_1 : i32, i32, i32, i32
  }
  func.func @transform_2(%arg0: i32) -> (i32, i32, i32, i32) {
    %c0_i32 = arith.constant 0 : i32
    %c0_i32_0 = arith.constant 0 : i32
    %c0_i32_1 = arith.constant 0 : i32
    %c0_i32_2 = arith.constant 0 : i32
    return %arg0, %c0_i32, %c0_i32_0, %c0_i32_1 : i32, i32, i32, i32
  }
}

</mosaic_0001>

<llo_original>
// kernel: tpu_custom_call.1
$region0: #{tpu_custom_call.1}
  #allocation0 [shape = 'u32[]', space=smem, size = 0x4, offset = 0x4, fixed_abs, tag = 'smem constant byte address 0x4 - core index']
  #allocation1 [shape = 'u32[144,128]{1,0:T(1,128)}', space=vmem, size = 0x12000, scoped, tag = 'internal scratch']
  %s0 = inlined_call_operand.vmem [shape: bf16[2,10,10,10], index: 0, kind: input, shape index: {}]
  %s1 = inlined_call_operand.hbm [shape: bf16[2,8,8,8], index: 1, kind: output, shape index: {0}]
  %s2 = inlined_call_operand.hbm [shape: f32[2,1,1,8], index: 2, kind: output, shape index: {1}]
  %3 = xla_tuple %s1, %s2
  %s4 = sld [smem:[#allocation0]]
  $region45: #{tpu_custom_call.1} parent=0
    _
  %s6 = ssub.s32 1, %s4
  %s7 = scalar_select 0, %s6, %s4
  $region1: #{tpu_custom_call.1} parent=0
    #allocation2 [shape = 'u8[32768]{0}', space=vmem, size = 0x8000, scoped, tag = 'output window, operand 0']
    #allocation3 [shape = 's32[2]{0}', space=sflag, size = 0x8, scoped, tag = 'scoped memory for tpu_custom_call.1']
    #allocation4 [shape = 'u8[1024]{0}', space=vmem, size = 0x400, scoped, tag = 'output window, operand 1']
    #allocation5 [shape = 's32[2]{0}', space=sflag, size = 0x8, scoped, tag = 'scoped memory for tpu_custom_call.1']
    %8 = vsyncpa [#allocation3], 0
    %s9 = scalar_lea.sflag [#allocation3], 1
    %10 = vsyncpa %s9, 0
    %11 = vsyncpa [#allocation5], 0
    %s12 = scalar_lea.sflag [#allocation5], 1
    %13 = vsyncpa %s12, 0
    loop: start=0, step=1, limit=4
    $region2: #{tpu_custom_call.1} parent=1 // loop_pre_header
      _
    $region3: #{tpu_custom_call.1} parent=1 // loop_header
      %s15 = sphi 0, %s19
      %p16 = scmp.ge.s32.totalorder %s15, 4
      %s25 = sphi 0, %s27
      %s28 = sphi 0, %s25
      %s29 = sphi 0, %s28
      %s45 = sphi 0, %s29
      %s51 = sphi 0, %s53
      %s54 = sphi 0, %s51
      %s55 = sphi 0, %s54
      %s71 = sphi 0, %s55
      %s77 = sphi 0, %s79
      %s80 = sphi 0, %s77
      %s81 = sphi 0, %s80
      %s97 = sphi 0, %s81
    $region4: #{tpu_custom_call.1} parent=1 // loop_header_branch
      %18 = sbr.rel (%p16) target = $region8
    $region5: #{tpu_custom_call.1} parent=1 // loop_body
      %s20 = ssub.s32 %s15, 1
      %s21 = ssub.s32 %s15, 2
      %s22 = sadd.s32 %s15, 1
      %s23 = ssub.s32 %s15, %s22
      %p24 = scmp.eq.s32.totalorder %s23, 0
      %s26 = sadd.s32 %s25, 1
      %s27 = scalar_select %p24, %s25, %s26
      %p30 = pneg %p24
      %p31 = scmp.eq.s32.totalorder %s15, 1
      %p32 = por %p30, %p31
      %p33 = scmp.ne.s32.totalorder %s25, %s28
      %p34 = scmp.eq.s32.totalorder %s15, 0
      %p35 = por %p33, %p34
      %p36 = scmp.ne.s32.totalorder %s25, %s28
      %p37 = scmp.eq.s32.totalorder %s20, 1
      %p38 = por %p36, %p37
      %p39 = scmp.ne.s32.totalorder %s28, %s29
      %p40 = scmp.eq.s32.totalorder %s20, 0
      %p41 = por %p39, %p40
      %p42 = scmp.ne.s32.totalorder %s28, %s29
      %p43 = scmp.eq.s32.totalorder %s21, 1
      %p44 = por %p42, %p43
      %p46 = scmp.ne.s32.totalorder %s29, %s45
      %p47 = scmp.eq.s32.totalorder %s21, 0
      %p48 = por %p46, %p47
      %s49 = ssub.s32 %s15, %s22
      %p50 = scmp.eq.s32.totalorder %s49, 0
      %s52 = sadd.s32 %s51, 1
      %s53 = scalar_select %p50, %s51, %s52
      %p56 = pneg %p50
      %p57 = scmp.eq.s32.totalorder %s15, 1
      %p58 = por %p56, %p57
      %p59 = scmp.ne.s32.totalorder %s51, %s54
      %p60 = scmp.eq.s32.totalorder %s15, 0
      %p61 = por %p59, %p60
      %p62 = scmp.ne.s32.totalorder %s51, %s54
      %p63 = scmp.eq.s32.totalorder %s20, 1
      %p64 = por %p62, %p63
      %p65 = scmp.ne.s32.totalorder %s54, %s55
      %p66 = scmp.eq.s32.totalorder %s20, 0
      %p67 = por %p65, %p66
      %p68 = scmp.ne.s32.totalorder %s54, %s55
      %p69 = scmp.eq.s32.totalorder %s21, 1
      %p70 = por %p68, %p69
      %p72 = scmp.ne.s32.totalorder %s55, %s71
      %p73 = scmp.eq.s32.totalorder %s21, 0
      %p74 = por %p72, %p73
      %s75 = ssub.s32 %s15, %s22
      %p76 = scmp.eq.s32.totalorder %s75, 0
      %s78 = sadd.s32 %s77, 1
      %s79 = scalar_select %p76, %s77, %s78
      %p82 = pneg %p76
      %p83 = scmp.eq.s32.totalorder %s15, 1
      %p84 = por %p82, %p83
      %p85 = scmp.ne.s32.totalorder %s77, %s80
      %p86 = scmp.eq.s32.totalorder %s15, 0
      %p87 = por %p85, %p86
      %p88 = scmp.ne.s32.totalorder %s77, %s80
      %p89 = scmp.eq.s32.totalorder %s20, 1
      %p90 = por %p88, %p89
      %p91 = scmp.ne.s32.totalorder %s80, %s81
      %p92 = scmp.eq.s32.totalorder %s20, 0
      %p93 = por %p91, %p92
      %p94 = scmp.ne.s32.totalorder %s80, %s81
      %p95 = scmp.eq.s32.totalorder %s21, 1
      %p96 = por %p94, %p95
      %p98 = scmp.ne.s32.totalorder %s81, %s97
      %p99 = scmp.eq.s32.totalorder %s21, 0
      %p100 = por %p98, %p99
      %p101 = scmp.le.s32.totalorder 1, %s15
      %p102 = scmp.lt.s32.totalorder %s15, 3
      %p103 = pnand %p101, %p102
      %p104 = pneg %p103
      // Predicated region
      $region9: #{tpu_custom_call.1} parent=5 // pred_check
        _
      $region10: #{tpu_custom_call.1} parent=5 // pred_check_branch
        %106 = sbr.rel (%p103) target = $region12
      $region11: #{tpu_custom_call.1} parent=5 // pred_region
        %s107 = ssub.s32 %s15, 1
      $region12: #{tpu_custom_call.1} parent=5 // pred_fallthru
        _
      %p108 = scmp.lt.s32.totalorder %s15, 2
      // Predicated region
      $region13: #{tpu_custom_call.1} parent=5 // pred_check
        %p109 = pneg %p108
      $region14: #{tpu_custom_call.1} parent=5 // pred_check_branch
        %111 = sbr.rel (%p109) target = $region16
      $region15: #{tpu_custom_call.1} parent=5 // pred_region
        // Predicated region
        $region17: #{tpu_custom_call.1} parent=15 // pred_check
          %p112 = pneg %p35
        $region18: #{tpu_custom_call.1} parent=15 // pred_check_branch
          %114 = sbr.rel (%p112) target = $region20
        $region19: #{tpu_custom_call.1} parent=15 // pred_region
          %p115 = scmp.lt.s32.totalorder %s15, 1
          %s116 = scalar_select %p115, %s15, 1
          %s117 = smul.addr %s116, 20
          %s118 = smul.addr %s117, 4
          %s119 = scalar_lea.vmem %s0, %s118
        $region20: #{tpu_custom_call.1} parent=15 // pred_fallthru
          _
      $region16: #{tpu_custom_call.1} parent=5 // pred_fallthru
        _
      %p120 = scmp.le.s32.totalorder 1, %s15
      %p121 = scmp.lt.s32.totalorder %s15, 3
      %p122 = pnand %p120, %p121
      %p123 = pneg %p122
      // Predicated region
      $region21: #{tpu_custom_call.1} parent=5 // pred_check
        _
      $region22: #{tpu_custom_call.1} parent=5 // pred_check_branch
        %125 = sbr.rel (%p122) target = $region24
      $region23: #{tpu_custom_call.1} parent=5 // pred_region
        %s126 = ssub.s32 %s15, 1
        %p127 = scmp.lt.s32.totalorder %s20, 1
        %s128 = scalar_select %p127, %s20, 1
        %s129 = smul.addr %s128, 20
        %s130 = smul.addr %s129, 4
        %s131 = scalar_lea.vmem %s0, %s130
        %p132 = pneg %p41
        %p133 = pneg %p38
        %p134 = pneg %p67
        %p135 = pneg %p64
        %s136 = sand.u32 %s54, 1
        %s137 = scalar_lea.sflag [#allocation3], %s136
        %s138 = sand.u32 %s54, 1
        %s139 = smul.addr %s138, 32
        %s140 = scalar_lea.vmem [#allocation2], %s139
        %p141 = pneg %p93
        %p142 = pneg %p90
        %s143 = sand.u32 %s80, 1
        %s144 = scalar_lea.sflag [#allocation5], %s143
        %s145 = sand.u32 %s80, 1
        %s146 = scalar_lea.vmem [#allocation4], %s145
        %p147 = scmp.lt.s32.totalorder %s20, 1
        %s148 = scalar_select %p147, %s20, 1
        %s149 = smul.addr %s148, 20
        %s150 = smul.addr %s149, 4
        %s151 = scalar_lea.vmem %s0, %s150
        %v152 = vld [vmem:[%s151] sm:$0xf]
        %v153 = vld [vmem:[%s151 + $0x4] sm:$0x1]
        %v154 = vld [vmem:[%s151 + $0x8] sm:$0xf]
        %v155 = vld [vmem:[%s151 + $0xc] sm:$0x1]
        %v156 = vld [vmem:[%s151 + $0x10] sm:$0xf]
        %v157 = vld [vmem:[%s151 + $0x14] sm:$0x1]
        %v158 = vld [vmem:[%s151 + $0x18] sm:$0xf]
        %v159 = vld [vmem:[%s151 + $0x1c] sm:$0x1]
        %v160 = vld [vmem:[%s151 + $0x20] sm:$0xf]
        %v161 = vld [vmem:[%s151 + $0x24] sm:$0x1]
        %v162 = vld [vmem:[%s151 + $0x28] sm:$0xf]
        %v163 = vld [vmem:[%s151 + $0x2c] sm:$0x1]
        %v164 = vld [vmem:[%s151 + $0x30] sm:$0xf]
        %v165 = vld [vmem:[%s151 + $0x34] sm:$0x1]
        %v166 = vld [vmem:[%s151 + $0x38] sm:$0xf]
        %v167 = vld [vmem:[%s151 + $0x3c] sm:$0x1]
        %v168 = vld [vmem:[%s151 + $0x40] sm:$0xf]
        %v169 = vld [vmem:[%s151 + $0x44] sm:$0x1]
        %v170 = vld [vmem:[%s151 + $0x48] sm:$0xf]
        %v171 = vld [vmem:[%s151 + $0x4c] sm:$0x1]
        %v172 = vunpack.c.l.bf16 %v152
        %v173 = vunpack.c.l.bf16 %v153
        %v174 = vunpack.c.l.bf16 %v154
        %v175 = vunpack.c.l.bf16 %v155
        %v176 = vunpack.c.l.bf16 %v156
        %v177 = vunpack.c.l.bf16 %v157
        %v178 = vunpack.c.l.bf16 %v158
        %v179 = vunpack.c.l.bf16 %v159
        %v180 = vunpack.c.l.bf16 %v160
        %v181 = vunpack.c.l.bf16 %v161
        %v182 = vunpack.c.l.bf16 %v162
        %v183 = vunpack.c.l.bf16 %v163
        %v184 = vunpack.c.l.bf16 %v164
        %v185 = vunpack.c.l.bf16 %v165
        %v186 = vunpack.c.l.bf16 %v166
        %v187 = vunpack.c.l.bf16 %v167
        %v188 = vunpack.c.l.bf16 %v168
        %v189 = vunpack.c.l.bf16 %v169
        %v190 = vunpack.c.l.bf16 %v170
        %v191 = vunpack.c.l.bf16 %v171
        %212 = vrot.lane.b32.xlu0 %v172, 127
        %v213 = vpop.permute.xlu0 %212
        %214 = vrot.lane.b32.xlu0 %v173, 127
        %v215 = vpop.permute.xlu0 %214
        %216 = vrot.lane.b32.xlu0 %v174, 127
        %v217 = vpop.permute.xlu0 %216
        %218 = vrot.lane.b32.xlu0 %v175, 127
        %v219 = vpop.permute.xlu0 %218
        %220 = vrot.lane.b32.xlu0 %v176, 127
        %v221 = vpop.permute.xlu0 %220
        %222 = vrot.lane.b32.xlu0 %v177, 127
        %v223 = vpop.permute.xlu0 %222
        %224 = vrot.lane.b32.xlu0 %v178, 127
        %v225 = vpop.permute.xlu0 %224
        %226 = vrot.lane.b32.xlu0 %v179, 127
        %v227 = vpop.permute.xlu0 %226
        %228 = vrot.lane.b32.xlu0 %v180, 127
        %v229 = vpop.permute.xlu0 %228
        %230 = vrot.lane.b32.xlu0 %v181, 127
        %v231 = vpop.permute.xlu0 %230
        %232 = vrot.lane.b32.xlu0 %v182, 127
        %v233 = vpop.permute.xlu0 %232
        %234 = vrot.lane.b32.xlu0 %v183, 127
        %v235 = vpop.permute.xlu0 %234
        %236 = vrot.lane.b32.xlu0 %v184, 127
        %v237 = vpop.permute.xlu0 %236
        %238 = vrot.lane.b32.xlu0 %v185, 127
        %v239 = vpop.permute.xlu0 %238
        %240 = vrot.lane.b32.xlu0 %v186, 127
        %v241 = vpop.permute.xlu0 %240
        %242 = vrot.lane.b32.xlu0 %v187, 127
        %v243 = vpop.permute.xlu0 %242
        %244 = vrot.lane.b32.xlu0 %v188, 127
        %v245 = vpop.permute.xlu0 %244
        %246 = vrot.lane.b32.xlu0 %v189, 127
        %v247 = vpop.permute.xlu0 %246
        %248 = vrot.lane.b32.xlu0 %v190, 127
        %v249 = vpop.permute.xlu0 %248
        %250 = vrot.lane.b32.xlu0 %v191, 127
        %v251 = vpop.permute.xlu0 %250
        %v272 = vmax.f32 %v172, %v213
        %v273 = vmax.f32 %v173, %v215
        %v274 = vmax.f32 %v174, %v217
        %v275 = vmax.f32 %v175, %v219
        %v276 = vmax.f32 %v176, %v221
        %v277 = vmax.f32 %v177, %v223
        %v278 = vmax.f32 %v178, %v225
        %v279 = vmax.f32 %v179, %v227
        %v280 = vmax.f32 %v180, %v229
        %v281 = vmax.f32 %v181, %v231
        %v282 = vmax.f32 %v182, %v233
        %v283 = vmax.f32 %v183, %v235
        %v284 = vmax.f32 %v184, %v237
        %v285 = vmax.f32 %v185, %v239
        %v286 = vmax.f32 %v186, %v241
        %v287 = vmax.f32 %v187, %v243
        %v288 = vmax.f32 %v188, %v245
        %v289 = vmax.f32 %v189, %v247
        %v290 = vmax.f32 %v190, %v249
        %v291 = vmax.f32 %v191, %v251
        %292 = vrot.lane.b32.xlu0 %v172, 126
        %v293 = vpop.permute.xlu0 %292
        %294 = vrot.lane.b32.xlu0 %v173, 126
        %v295 = vpop.permute.xlu0 %294
        %296 = vrot.lane.b32.xlu0 %v174, 126
        %v297 = vpop.permute.xlu0 %296
        %298 = vrot.lane.b32.xlu0 %v175, 126
        %v299 = vpop.permute.xlu0 %298
        %300 = vrot.lane.b32.xlu0 %v176, 126
        %v301 = vpop.permute.xlu0 %300
        %302 = vrot.lane.b32.xlu0 %v177, 126
        %v303 = vpop.permute.xlu0 %302
        %304 = vrot.lane.b32.xlu0 %v178, 126
        %v305 = vpop.permute.xlu0 %304
        %306 = vrot.lane.b32.xlu0 %v179, 126
        %v307 = vpop.permute.xlu0 %306
        %308 = vrot.lane.b32.xlu0 %v180, 126
        %v309 = vpop.permute.xlu0 %308
        %310 = vrot.lane.b32.xlu0 %v181, 126
        %v311 = vpop.permute.xlu0 %310
        %312 = vrot.lane.b32.xlu0 %v182, 126
        %v313 = vpop.permute.xlu0 %312
        %314 = vrot.lane.b32.xlu0 %v183, 126
        %v315 = vpop.permute.xlu0 %314
        %316 = vrot.lane.b32.xlu0 %v184, 126
        %v317 = vpop.permute.xlu0 %316
        %318 = vrot.lane.b32.xlu0 %v185, 126
        %v319 = vpop.permute.xlu0 %318
        %320 = vrot.lane.b32.xlu0 %v186, 126
        %v321 = vpop.permute.xlu0 %320
        %322 = vrot.lane.b32.xlu0 %v187, 126
        %v323 = vpop.permute.xlu0 %322
        %324 = vrot.lane.b32.xlu0 %v188, 126
        %v325 = vpop.permute.xlu0 %324
        %326 = vrot.lane.b32.xlu0 %v189, 126
        %v327 = vpop.permute.xlu0 %326
        %328 = vrot.lane.b32.xlu0 %v190, 126
        %v329 = vpop.permute.xlu0 %328
        %330 = vrot.lane.b32.xlu0 %v191, 126
        %v331 = vpop.permute.xlu0 %330
        %v352 = vmax.f32 %v272, %v293
        %v353 = vmax.f32 %v273, %v295
        %v354 = vmax.f32 %v274, %v297
        %v355 = vmax.f32 %v275, %v299
        %v356 = vmax.f32 %v276, %v301
        %v357 = vmax.f32 %v277, %v303
        %v358 = vmax.f32 %v278, %v305
        %v359 = vmax.f32 %v279, %v307
        %v360 = vmax.f32 %v280, %v309
        %v361 = vmax.f32 %v281, %v311
        %v362 = vmax.f32 %v282, %v313
        %v363 = vmax.f32 %v283, %v315
        %v364 = vmax.f32 %v284, %v317
        %v365 = vmax.f32 %v285, %v319
        %v366 = vmax.f32 %v286, %v321
        %v367 = vmax.f32 %v287, %v323
        %v368 = vmax.f32 %v288, %v325
        %v369 = vmax.f32 %v289, %v327
        %v370 = vmax.f32 %v290, %v329
        %v371 = vmax.f32 %v291, %v331
        %vm392 = vcmask 1046528
        %v393 = vrot.slane %v352, 1
        %v394 = vrot.slane %v353, 1
        %v395 = vsel %vm392, %v393, %v394
        %v396 = vrot.slane %v354, 1
        %v397 = vrot.slane %v355, 1
        %v398 = vsel %vm392, %v396, %v397
        %v399 = vrot.slane %v356, 1
        %v400 = vrot.slane %v357, 1
        %v401 = vsel %vm392, %v399, %v400
        %v402 = vrot.slane %v358, 1
        %v403 = vrot.slane %v359, 1
        %v404 = vsel %vm392, %v402, %v403
        %v405 = vrot.slane %v360, 1
        %v406 = vrot.slane %v361, 1
        %v407 = vsel %vm392, %v405, %v406
        %v408 = vrot.slane %v362, 1
        %v409 = vrot.slane %v363, 1
        %v410 = vsel %vm392, %v408, %v409
        %v411 = vrot.slane %v364, 1
        %v412 = vrot.slane %v365, 1
        %v413 = vsel %vm392, %v411, %v412
        %v414 = vrot.slane %v366, 1
        %v415 = vrot.slane %v367, 1
        %v416 = vsel %vm392, %v414, %v415
        %v417 = vrot.slane %v368, 1
        %v418 = vrot.slane %v369, 1
        %v419 = vsel %vm392, %v417, %v418
        %v420 = vrot.slane %v370, 1
        %v421 = vrot.slane %v371, 1
        %v422 = vsel %vm392, %v420, %v421
        %v433 = vmax.f32 %v352, %v395
        %v434 = vmax.f32 %v354, %v398
        %v435 = vmax.f32 %v356, %v401
        %v436 = vmax.f32 %v358, %v404
        %v437 = vmax.f32 %v360, %v407
        %v438 = vmax.f32 %v362, %v410
        %v439 = vmax.f32 %v364, %v413
        %v440 = vmax.f32 %v366, %v416
        %v441 = vmax.f32 %v368, %v419
        %v442 = vmax.f32 %v370, %v422
        %vm443 = vcmask 1045504
        %v444 = vrot.slane %v352, 2
        %v445 = vrot.slane %v353, 2
        %v446 = vsel %vm443, %v444, %v445
        %v447 = vrot.slane %v354, 2
        %v448 = vrot.slane %v355, 2
        %v449 = vsel %vm443, %v447, %v448
        %v450 = vrot.slane %v356, 2
        %v451 = vrot.slane %v357, 2
        %v452 = vsel %vm443, %v450, %v451
        %v453 = vrot.slane %v358, 2
        %v454 = vrot.slane %v359, 2
        %v455 = vsel %vm443, %v453, %v454
        %v456 = vrot.slane %v360, 2
        %v457 = vrot.slane %v361, 2
        %v458 = vsel %vm443, %v456, %v457
        %v459 = vrot.slane %v362, 2
        %v460 = vrot.slane %v363, 2
        %v461 = vsel %vm443, %v459, %v460
        %v462 = vrot.slane %v364, 2
        %v463 = vrot.slane %v365, 2
        %v464 = vsel %vm443, %v462, %v463
        %v465 = vrot.slane %v366, 2
        %v466 = vrot.slane %v367, 2
        %v467 = vsel %vm443, %v465, %v466
        %v468 = vrot.slane %v368, 2
        %v469 = vrot.slane %v369, 2
        %v470 = vsel %vm443, %v468, %v469
        %v471 = vrot.slane %v370, 2
        %v472 = vrot.slane %v371, 2
        %v473 = vsel %vm443, %v471, %v472
        %v484 = vmax.f32 %v433, %v446
        %v485 = vmax.f32 %v434, %v449
        %v486 = vmax.f32 %v435, %v452
        %v487 = vmax.f32 %v436, %v455
        %v488 = vmax.f32 %v437, %v458
        %v489 = vmax.f32 %v438, %v461
        %v490 = vmax.f32 %v439, %v464
        %v491 = vmax.f32 %v440, %v467
        %v492 = vmax.f32 %v441, %v470
        %v493 = vmax.f32 %v442, %v473
        %v494 = vmax.f32 %v484, %v485
        %v495 = vmax.f32 %v485, %v486
        %v496 = vmax.f32 %v486, %v487
        %v497 = vmax.f32 %v487, %v488
        %v498 = vmax.f32 %v488, %v489
        %v499 = vmax.f32 %v489, %v490
        %v500 = vmax.f32 %v490, %v491
        %v501 = vmax.f32 %v491, %v492
        %v502 = vmax.f32 %v494, %v486
        %v503 = vmax.f32 %v495, %v487
        %v504 = vmax.f32 %v496, %v488
        %v505 = vmax.f32 %v497, %v489
        %v506 = vmax.f32 %v498, %v490
        %v507 = vmax.f32 %v499, %v491
        %v508 = vmax.f32 %v500, %v492
        %v509 = vmax.f32 %v501, %v493
        %v510 = vsub.f32 1.0, %v502
        %v511 = vsub.f32 1.0, %v503
        %v512 = vsub.f32 1.0, %v504
        %v513 = vsub.f32 1.0, %v505
        %v514 = vsub.f32 1.0, %v506
        %v515 = vsub.f32 1.0, %v507
        %v516 = vsub.f32 1.0, %v508
        %v517 = vsub.f32 1.0, %v509
        %v518 = vpack.c.bf16 %v510, %v510
        %v519 = vpack.c.bf16 %v511, %v511
        %v520 = vpack.c.bf16 %v512, %v512
        %v521 = vpack.c.bf16 %v513, %v513
        %v522 = vpack.c.bf16 %v514, %v514
        %v523 = vpack.c.bf16 %v515, %v515
        %v524 = vpack.c.bf16 %v516, %v516
        %v525 = vpack.c.bf16 %v517, %v517
        %vm526 = vcmask 60416
        %527 = vst.msk [vmem:[%s140] sm:$0xf] %vm526, %v518
        %528 = vst.msk [vmem:[%s140 + $0x4] sm:$0xf] %vm526, %v519
        %529 = vst.msk [vmem:[%s140 + $0x8] sm:$0xf] %vm526, %v520
        %530 = vst.msk [vmem:[%s140 + $0xc] sm:$0xf] %vm526, %v521
        %531 = vst.msk [vmem:[%s140 + $0x10] sm:$0xf] %vm526, %v522
        %532 = vst.msk [vmem:[%s140 + $0x14] sm:$0xf] %vm526, %v523
        %533 = vst.msk [vmem:[%s140 + $0x18] sm:$0xf] %vm526, %v524
        %534 = vst.msk [vmem:[%s140 + $0x1c] sm:$0xf] %vm526, %v525
        %vm535 = vcmask 64512
        %v536 = vsel %vm535, %v510, 0.0
        %v537 = vsel %vm535, %v511, 0.0
        %v538 = vadd.f32 %v536, %v537
        %v539 = vsel %vm535, %v512, 0.0
        %v540 = vadd.f32 %v538, %v539
        %v541 = vsel %vm535, %v513, 0.0
        %v542 = vadd.f32 %v540, %v541
        %v543 = vsel %vm535, %v514, 0.0
        %v544 = vadd.f32 %v542, %v543
        %v545 = vsel %vm535, %v515, 0.0
        %v546 = vadd.f32 %v544, %v545
        %v547 = vsel %vm535, %v516, 0.0
        %v548 = vadd.f32 %v546, %v547
        %v549 = vsel %vm535, %v517, 0.0
        %v550 = vadd.f32 %v548, %v549
        %v551 = vrot.slane %v550, 4
        %v552 = vadd.f32 %v550, %v551
        %v553 = vrot.slane %v552, 2
        %v554 = vadd.f32 %v552, %v553
        %v555 = vrot.slane %v554, 1
        %v556 = vadd.f32 %v554, %v555
        %vm557 = vcmask 57344
        %558 = vst.msk [vmem:[%s146] sm:$0x1] %vm557, %v556
        %s559 = sand.u32 %s54, 1
        %s560 = scalar_lea.sflag [#allocation3], %s559
        %s561 = sand.u32 %s54, 1
        %s562 = smul.addr %s561, 32
        %s563 = scalar_lea.vmem [#allocation2], %s562
        %s564 = sand.u32 %s80, 1
        %s565 = scalar_lea.sflag [#allocation5], %s564
        %s566 = sand.u32 %s80, 1
        %s567 = scalar_lea.vmem [#allocation4], %s566
        // Predicated region
        $region25: #{tpu_custom_call.1} parent=23 // pred_check
          %p568 = pneg %p64
        $region26: #{tpu_custom_call.1} parent=23 // pred_check_branch
          %570 = sbr.rel (%p568) target = $region28
        $region27: #{tpu_custom_call.1} parent=23 // pred_region
          %s572 = ssub.s32 512, 512
          %573 = vsyncadd %s560, %s572
          %s574 = smul.addr %s20, 8
          %s575 = smul.addr %s574, 64
          %s576 = scalar_lea.hbm %s1, %s575
          %s577 = sshll.u32 %s563, 4
          %s578 = int_to_ptr.vmem [resolvable:$true] %s577
          %583 = dma.vmem_to_hbm [thread:$0]  %s578, 512, %s576, %s560, 64, 64, 4
        $region28: #{tpu_custom_call.1} parent=23 // pred_fallthru
          _
        // Predicated region
        $region29: #{tpu_custom_call.1} parent=23 // pred_check
          %p584 = pneg %p90
        $region30: #{tpu_custom_call.1} parent=23 // pred_check_branch
          %586 = sbr.rel (%p584) target = $region32
        $region31: #{tpu_custom_call.1} parent=23 // pred_region
          %s588 = ssub.s32 16, 16
          %589 = vsyncadd %s565, %s588
          %s590 = smul.addr %s20, 16
          %s591 = scalar_lea.hbm %s2, %s590
          %s593 = sshll.u32 %s567, 4
          %s594 = int_to_ptr.vmem [resolvable:$true] %s593
          %596 = dma.vmem_to_hbm [thread:$0]  %s594, 16, %s591, %s565
        $region32: #{tpu_custom_call.1} parent=23 // pred_fallthru
          _
      $region24: #{tpu_custom_call.1} parent=5 // pred_fallthru
        _
      %p597 = scmp.le.s32.totalorder 2, %s15
      // Predicated region
      $region33: #{tpu_custom_call.1} parent=5 // pred_check
        %p598 = pneg %p597
      $region34: #{tpu_custom_call.1} parent=5 // pred_check_branch
        %600 = sbr.rel (%p598) target = $region36
      $region35: #{tpu_custom_call.1} parent=5 // pred_region
        %s601 = ssub.s32 %s15, 2
        // Predicated region
        $region37: #{tpu_custom_call.1} parent=35 // pred_check
          %p602 = pneg %p70
        $region38: #{tpu_custom_call.1} parent=35 // pred_check_branch
          %604 = sbr.rel (%p602) target = $region40
        $region39: #{tpu_custom_call.1} parent=35 // pred_region
          %s605 = sand.u32 %s55, 1
          %s606 = scalar_lea.sflag [#allocation3], %s605
          %s607 = sand.u32 %s55, 1
          %s608 = smul.addr %s607, 32
          %s609 = scalar_lea.vmem [#allocation2], %s608
          %610 = dma.done %s606, 512
        $region40: #{tpu_custom_call.1} parent=35 // pred_fallthru
          _
        // Predicated region
        $region41: #{tpu_custom_call.1} parent=35 // pred_check
          %p611 = pneg %p96
        $region42: #{tpu_custom_call.1} parent=35 // pred_check_branch
          %613 = sbr.rel (%p611) target = $region44
        $region43: #{tpu_custom_call.1} parent=35 // pred_region
          %s614 = sand.u32 %s81, 1
          %s615 = scalar_lea.sflag [#allocation5], %s614
          %s616 = sand.u32 %s81, 1
          %s617 = scalar_lea.vmem [#allocation4], %s616
          %618 = dma.done %s615, 16
        $region44: #{tpu_custom_call.1} parent=35 // pred_fallthru
          _
      $region36: #{tpu_custom_call.1} parent=5 // pred_fallthru
        _
    $region6: #{tpu_custom_call.1} parent=1 // loop_footer
      %s19 = sadd.s32 1, %s15
    $region7: #{tpu_custom_call.1} parent=1 // loop_footer_branch
      %14 = sbr.rel target = $region3
    $region8: #{tpu_custom_call.1} parent=1 // loop_exit
      _
    %619 = vsyncpa [#allocation3], 1
    %s620 = scalar_lea.sflag [#allocation3], 1
    %621 = vsyncpa %s620, 1
    %622 = vsyncpa [#allocation5], 1
    %s623 = scalar_lea.sflag [#allocation5], 1
    %624 = vsyncpa %s623, 1

</llo_original>
